<compile_context>
chip_gen: v7x
topology: tpu7x:2x2x1
jax: 0.10.0
libtpu: 0.0.40
codegen_flags: <defaults>
</compile_context>

<pallas_src>
import math
from functools import partial

import jax
import jax.numpy as jnp
import numpy as np
from jax import lax
from jax.experimental import pallas as pl
from jax.experimental.pallas import tpu as pltpu


def _linear_attention_kernel(x_ref, w_qkv_ref, w_out_ref, b_out_ref,
                             gn_w_ref, gn_b_ref, head_mask_ref, o_ref,
                             *, heads, dim_head, n_valid, scale, eps,
                             mxu_dtype):
    hidden = heads * dim_head
    x = x_ref[0]                                    # (C, N_pad)
    c, n_pad = x.shape

    # --- fused qkv projection: ONE MXU matmul, bf16 operands, f32 accum -----
    qkv = jnp.dot(w_qkv_ref[...].astype(mxu_dtype), x.astype(mxu_dtype),
                  preferred_element_type=jnp.float32)        # (3*hidden, N) f32
    q = qkv[:hidden]
    k = qkv[hidden:2 * hidden]
    v = qkv[2 * hidden:]

    # Lane mask for the padded tail of N (only materialized if padding exists).
    if n_valid != n_pad:
        lane_mask = (lax.broadcasted_iota(jnp.int32, (1, n_pad), 1)
                     < n_valid).astype(jnp.float32)
    else:
        lane_mask = None

    # --- q: softmax over dim_head (per head, per position); scale folded ----
    q3 = q.reshape(heads, dim_head, n_pad)
    q3 = jnp.exp(q3 - jnp.max(q3, axis=1, keepdims=True))
    q3 = q3 * (scale * pl.reciprocal(jnp.sum(q3, axis=1, keepdims=True),
                                     approx=True))
    q = q3.reshape(hidden, n_pad)

    # --- k: softmax over the spatial axis (padded lanes excluded) -----------
    k = jnp.exp(k - jnp.max(k, axis=1, keepdims=True))
    if lane_mask is not None:
        k = k * lane_mask
    k = k * pl.reciprocal(jnp.sum(k, axis=1, keepdims=True), approx=True)

    # --- fused-heads context: (hidden, hidden) = K @ V^T, block-diag mask ---
    context = lax.dot_general(k.astype(mxu_dtype), v.astype(mxu_dtype),
                              (((1,), (1,)), ((), ())),
                              preferred_element_type=jnp.float32)
    context = context * head_mask_ref[...]          # resident mask, DMA'd once

    # --- fold to_out into the tiny context (associativity):
    #     w_ctx[c,(h,d)] = sum_{(h,e)} w_out[c,(h,e)] * context[(h,d),(h,e)]
    w_ctx = lax.dot_general(w_out_ref[...].astype(mxu_dtype),
                            context.astype(mxu_dtype),
                            (((1,), (1,)), ((), ())),
                            preferred_element_type=jnp.float32)   # (C, hidden)

    # --- y = w_ctx @ q + bias  (replaces attn matmul + to_out matmul) -------
    y = jnp.dot(w_ctx.astype(mxu_dtype), q.astype(mxu_dtype),
                preferred_element_type=jnp.float32)               # (C, N)
    y = y + b_out_ref[...].astype(jnp.float32)

    # --- GroupNorm(num_groups=1): single pass, padded lanes excluded --------
    ym = y if lane_mask is None else y * lane_mask
    inv_count = 1.0 / (c * n_valid)
    s1 = jnp.sum(ym, axis=(0, 1), keepdims=True)                  # (1, 1)
    s2 = jnp.sum(ym * ym, axis=(0, 1), keepdims=True)             # (1, 1)
    mean = s1 * inv_count
    var = s2 * inv_count - mean * mean
    rstd = lax.rsqrt(var + eps)
    # Folded affine: one FMA-style pass over (C, N).
    a = rstd * gn_w_ref[...].astype(jnp.float32)                  # (C, 1)
    b = gn_b_ref[...].astype(jnp.float32) - mean * a              # (C, 1)
    o_ref[0] = (y * a + b).astype(o_ref.dtype)


def linear_attention(x, w_qkv, w_out, b_out, gn_w, gn_b, *, heads, dim_head,
                     mxu_dtype=jnp.bfloat16):
    b, c, h, w = x.shape
    n = h * w
    hidden = heads * dim_head
    # Sublane-alignment so the f32 row slices / (heads, dim_head, N) reshape
    # are layout no-ops (no relayout copies).
    assert dim_head % 8 == 0, "dim_head must be a multiple of 8 (sublane tile)"
    assert c % 8 == 0, "channels must be a multiple of 8 (sublane tile)"
    n_pad = max(128, ((n + 127) // 128) * 128)

    x_flat = x.reshape(b, c, n)
    if n_pad != n:
        x_flat = jnp.pad(x_flat, ((0, 0), (0, 0), (0, n_pad - n)))

    # Static per-head block-diagonal mask, passed in as a resident input.
    hm = (np.arange(hidden)[:, None] // dim_head
          == np.arange(hidden)[None, :] // dim_head)
    head_mask = jnp.asarray(hm, dtype=jnp.float32)

    kernel = partial(_linear_attention_kernel,
                     heads=heads, dim_head=dim_head, n_valid=n,
                     scale=dim_head ** (-0.5), eps=1e-5, mxu_dtype=mxu_dtype)

    # Scoped-VMEM sizing: <= ~80% of physical VMEM (v7x: never request the
    # full 64 MiB; v5e/v6e: up to ~100 MiB usable for big C*N).
    try:
        vmem_cap = pltpu.get_tpu_info().vmem_capacity_bytes
    except Exception:  # pragma: no cover - conservative fallback
        vmem_cap = 128 * 1024 * 1024
    budget = int(0.80 * vmem_cap)
    itemsize = jnp.dtype(x.dtype).itemsize
    est = (2 * 2 * c * n_pad * itemsize                      # dbl-buf in/out blocks
           + n_pad * (3 * hidden + 2 * hidden + c) * 4       # qkv + softmax temps + y
           + (3 * hidden * c + 2 * c * hidden + hidden * hidden + 3 * c) * 4)
    vmem_limit = int(min(budget, max(32 * 1024 * 1024, 3 * est)))
    # TODO(synk): if 3*est > budget (v7x, large C*N) tile N in the grid with
    # online context / GroupNorm accumulation instead of the whole-image block.

    out = pl.pallas_call(
        kernel,
        out_shape=jax.ShapeDtypeStruct((b, c, n_pad), x.dtype),
        grid_spec=pltpu.PrefetchScalarGridSpec(
            num_scalar_prefetch=0,
            grid=(b,),
            in_specs=[
                pl.BlockSpec((1, c, n_pad), lambda i: (i, 0, 0)),      # x
                pl.BlockSpec((3 * hidden, c), lambda i: (0, 0)),       # w_qkv
                pl.BlockSpec((c, hidden), lambda i: (0, 0)),           # w_out
                pl.BlockSpec((c, 1), lambda i: (0, 0)),                # b_out
                pl.BlockSpec((c, 1), lambda i: (0, 0)),                # gn weight
                pl.BlockSpec((c, 1), lambda i: (0, 0)),                # gn bias
                pl.BlockSpec((hidden, hidden), lambda i: (0, 0)),      # head mask
            ],
            out_specs=pl.BlockSpec((1, c, n_pad), lambda i: (i, 0, 0)),
        ),
        compiler_params=pltpu.CompilerParams(
            dimension_semantics=("parallel",),
            vmem_limit_bytes=vmem_limit),
    )(x_flat, w_qkv, w_out,
      b_out.reshape(c, 1), gn_w.reshape(c, 1), gn_b.reshape(c, 1), head_mask)

    return out[:, :, :n].reshape(b, c, h, w)


def linear_attention_ref(x, w_qkv, w_out, b_out, gn_w, gn_b, *, heads, dim_head):
    """Pure-JAX reference mirroring the PyTorch module (f32 throughout)."""
    b, c, h, w = x.shape
    n = h * w
    hidden = heads * dim_head
    scale = dim_head ** (-0.5)
    x_flat = x.reshape(b, c, n)
    qkv = jnp.einsum('oc,bcn->bon', w_qkv, x_flat)               # (b, 3*hidden, n)
    q, k, v = jnp.split(qkv, 3, axis=1)
    q = q.reshape(b, heads, dim_head, n)
    k = k.reshape(b, heads, dim_head, n)
    v = v.reshape(b, heads, dim_head, n)
    q = jax.nn.softmax(q, axis=-2) * scale
    k = jax.nn.softmax(k, axis=-1)
    context = jnp.einsum('bhdn,bhen->bhde', k, v)
    out = jnp.einsum('bhde,bhdn->bhen', context, q)
    out = out.reshape(b, hidden, n)
    y = jnp.einsum('oc,bcn->bon', w_out, out) + b_out[None, :, None]
    mean = jnp.mean(y, axis=(1, 2), keepdims=True)
    var = jnp.mean((y - mean) ** 2, axis=(1, 2), keepdims=True)
    y = (y - mean) / jnp.sqrt(var + 1e-5)
    y = y * gn_w[None, :, None] + gn_b[None, :, None]
    return y.reshape(b, c, h, w)


if __name__ == "__main__":
    # Small, forward-consistent shapes (N = 64 exercises the lane-pad path).
    B, C, H, W = 2, 8, 8, 8
    HEADS, DIM_HEAD = 2, 8
    HIDDEN = HEADS * DIM_HEAD

    key = jax.random.PRNGKey(0)
    k1, k2, k3, k4, k5, k6 = jax.random.split(key, 6)

    x = jax.random.normal(k1, (B, C, H, W), dtype=jnp.float32)

    # Conv2d weights are (out_ch, in_ch, 1, 1) in PyTorch -> keep as (out, in)
    w_qkv = jax.random.normal(k2, (3 * HIDDEN, C), dtype=jnp.float32) * (1.0 / math.sqrt(C))
    w_out = jax.random.normal(k3, (C, HIDDEN), dtype=jnp.float32) * (1.0 / math.sqrt(HIDDEN))
    b_out = jax.random.normal(k4, (C,), dtype=jnp.float32) * 0.1
    gn_w = 1.0 + 0.1 * jax.random.normal(k5, (C,), dtype=jnp.float32)
    gn_b = 0.1 * jax.random.normal(k6, (C,), dtype=jnp.float32)

    out = linear_attention(x, w_qkv, w_out, b_out, gn_w, gn_b,
                           heads=HEADS, dim_head=DIM_HEAD)
    out = jax.block_until_ready(out)

    ref = linear_attention_ref(x, w_qkv, w_out, b_out, gn_w, gn_b,
                               heads=HEADS, dim_head=DIM_HEAD)
    # 2e-2 tolerance: bf16 MXU operands (f32 accumulation) + EUP approx
    # reciprocal are deliberate precision trades per the perf review.
    np.testing.assert_allclose(np.asarray(out), np.asarray(ref),
                               rtol=2e-2, atol=2e-2)
    print("KERNEL_OK")
</pallas_src>

<mosaic_0001>
module attributes {stable_mosaic.version = 11 : i64} {
  func.func @_linear_attention_kernel(%arg0: i32, %arg1: memref<1x8x128xf32, #tpu.memory_space<vmem>>, %arg2: memref<48x8xf32, #tpu.memory_space<vmem>>, %arg3: memref<8x16xf32, #tpu.memory_space<vmem>>, %arg4: memref<8x1xf32, #tpu.memory_space<vmem>>, %arg5: memref<8x1xf32, #tpu.memory_space<vmem>>, %arg6: memref<8x1xf32, #tpu.memory_space<vmem>>, %arg7: memref<16x16xf32, #tpu.memory_space<vmem>>, %arg8: memref<1x8x128xf32, #tpu.memory_space<vmem>>) attributes {dimension_semantics = [#tpu.dimension_semantics<parallel>], iteration_bounds = array<i64: 2>, scalar_prefetch = 0 : i64, scratch_operands = 0 : i64, tpu.core_type = #tpu.core_type<tc>, window_params = [{transform_indices = @transform_0, window_bounds = array<i64: 1, 8, 128>}, {pipeline_mode = #tpu.pipeline_mode<synchronous>, transform_indices = @transform_1, window_bounds = array<i64: 48, 8>}, {pipeline_mode = #tpu.pipeline_mode<synchronous>, transform_indices = @transform_2, window_bounds = array<i64: 8, 16>}, {pipeline_mode = #tpu.pipeline_mode<synchronous>, transform_indices = @transform_3, window_bounds = array<i64: 8, 1>}, {pipeline_mode = #tpu.pipeline_mode<synchronous>, transform_indices = @transform_4, window_bounds = array<i64: 8, 1>}, {pipeline_mode = #tpu.pipeline_mode<synchronous>, transform_indices = @transform_5, window_bounds = array<i64: 8, 1>}, {pipeline_mode = #tpu.pipeline_mode<synchronous>, transform_indices = @transform_6, window_bounds = array<i64: 16, 16>}, {transform_indices = @transform_7, window_bounds = array<i64: 1, 8, 128>}]} {
    %c0 = arith.constant 0 : index
    %c0_0 = arith.constant 0 : index
    %c0_1 = arith.constant 0 : index
    %0 = vector.load %arg1[%c0, %c0_0, %c0_1] : memref<1x8x128xf32, #tpu.memory_space<vmem>>, vector<1x8x128xf32>
    %1 = vector.shape_cast %0 : vector<1x8x128xf32> to vector<8x128xf32>
    %c0_2 = arith.constant 0 : index
    %c0_3 = arith.constant 0 : index
    %2 = vector.load %arg2[%c0_2, %c0_3] : memref<48x8xf32, #tpu.memory_space<vmem>>, vector<48x8xf32>
    %3 = arith.truncf %2 : vector<48x8xf32> to vector<48x8xbf16>
    %4 = arith.truncf %1 : vector<8x128xf32> to vector<8x128xbf16>
    %cst = arith.constant dense<0.000000e+00> : vector<48x128xf32>
    %5 = tpu.matmul %3, %4, %cst {dimension_numbers = #tpu.dot_dimension_numbers<[1], [0], [0], [1], [0, 0, 1, 1], [], []>} : vector<48x8xbf16>, vector<8x128xbf16>, vector<48x128xf32> -> vector<48x128xf32>
    %6 = vector.extract_strided_slice %5 {offsets = [0, 0], sizes = [16, 128], strides = [1, 1]} : vector<48x128xf32> to vector<16x128xf32>
    %7 = vector.extract_strided_slice %5 {offsets = [16, 0], sizes = [16, 128], strides = [1, 1]} : vector<48x128xf32> to vector<16x128xf32>
    %8 = vector.extract_strided_slice %5 {offsets = [32, 0], sizes = [16, 128], strides = [1, 1]} : vector<48x128xf32> to vector<16x128xf32>
    %9 = tpu.iota {dimensions = array<i32: 1>} : vector<1x128xi32>
    %c64_i32 = arith.constant 64 : i32
    %10 = vector.broadcast %c64_i32 : i32 to vector<1x128xi32>
    %11 = arith.cmpi slt, %9, %10 : vector<1x128xi32>
    %12 = arith.extui %11 : vector<1x128xi1> to vector<1x128xi32>
    %13 = arith.sitofp %12 : vector<1x128xi32> to vector<1x128xf32>
    %14 = vector.shape_cast %6 : vector<16x128xf32> to vector<2x8x128xf32>
    %cst_4 = arith.constant dense<0xFF800000> : vector<2x128xf32>
    %15 = vector.multi_reduction <maximumf>, %14, %cst_4 [1] : vector<2x8x128xf32> to vector<2x128xf32>
    %16 = vector.shape_cast %15 : vector<2x128xf32> to vector<2x1x128xf32>
    %17 = vector.broadcast %16 : vector<2x1x128xf32> to vector<2x8x128xf32>
    %18 = arith.subf %14, %17 : vector<2x8x128xf32>
    %19 = math.exp %18 : vector<2x8x128xf32>
    %cst_5 = arith.constant dense<0.000000e+00> : vector<2x128xf32>
    %20 = vector.multi_reduction <add>, %19, %cst_5 [1] : vector<2x8x128xf32> to vector<2x128xf32>
    %21 = vector.shape_cast %20 : vector<2x128xf32> to vector<2x1x128xf32>
    %22 = tpu.reciprocal %21 {approx = true} : vector<2x1x128xf32> -> vector<2x1x128xf32>
    %cst_6 = arith.constant 0.353553385 : f32
    %23 = vector.broadcast %cst_6 : f32 to vector<2x1x128xf32>
    %24 = arith.mulf %23, %22 : vector<2x1x128xf32>
    %25 = vector.broadcast %24 : vector<2x1x128xf32> to vector<2x8x128xf32>
    %26 = arith.mulf %19, %25 : vector<2x8x128xf32>
    %27 = vector.shape_cast %26 : vector<2x8x128xf32> to vector<16x128xf32>
    %cst_7 = arith.constant dense<0xFF800000> : vector<16xf32>
    %28 = vector.multi_reduction <maximumf>, %7, %cst_7 [1] : vector<16x128xf32> to vector<16xf32>
    %29 = vector.shape_cast %28 : vector<16xf32> to vector<16x1xf32>
    %30 = vector.broadcast %29 : vector<16x1xf32> to vector<16x128xf32>
    %31 = arith.subf %7, %30 : vector<16x128xf32>
    %32 = math.exp %31 : vector<16x128xf32>
    %33 = vector.broadcast %13 : vector<1x128xf32> to vector<16x128xf32>
    %34 = arith.mulf %32, %33 : vector<16x128xf32>
    %cst_8 = arith.constant dense<0.000000e+00> : vector<16xf32>
    %35 = vector.multi_reduction <add>, %34, %cst_8 [1] : vector<16x128xf32> to vector<16xf32>
    %36 = vector.shape_cast %35 : vector<16xf32> to vector<16x1xf32>
    %37 = tpu.reciprocal %36 {approx = true} : vector<16x1xf32> -> vector<16x1xf32>
    %38 = vector.broadcast %37 : vector<16x1xf32> to vector<16x128xf32>
    %39 = arith.mulf %34, %38 : vector<16x128xf32>
    %40 = arith.truncf %39 : vector<16x128xf32> to vector<16x128xbf16>
    %41 = arith.truncf %8 : vector<16x128xf32> to vector<16x128xbf16>
    %cst_9 = arith.constant dense<0.000000e+00> : vector<16x16xf32>
    %42 = tpu.matmul %40, %41, %cst_9 {dimension_numbers = #tpu.dot_dimension_numbers<[1], [1], [0], [0], [0, 0, 1, 0], [], []>} : vector<16x128xbf16>, vector<16x128xbf16>, vector<16x16xf32> -> vector<16x16xf32>
    %c0_10 = arith.constant 0 : index
    %c0_11 = arith.constant 0 : index
    %43 = vector.load %arg7[%c0_10, %c0_11] : memref<16x16xf32, #tpu.memory_space<vmem>>, vector<16x16xf32>
    %44 = arith.mulf %42, %43 : vector<16x16xf32>
    %c0_12 = arith.constant 0 : index
    %c0_13 = arith.constant 0 : index
    %45 = vector.load %arg3[%c0_12, %c0_13] : memref<8x16xf32, #tpu.memory_space<vmem>>, vector<8x16xf32>
    %46 = arith.truncf %45 : vector<8x16xf32> to vector<8x16xbf16>
    %47 = arith.truncf %44 : vector<16x16xf32> to vector<16x16xbf16>
    %cst_14 = arith.constant dense<0.000000e+00> : vector<8x16xf32>
    %48 = tpu.matmul %46, %47, %cst_14 {dimension_numbers = #tpu.dot_dimension_numbers<[1], [1], [0], [0], [0, 0, 1, 0], [], []>} : vector<8x16xbf16>, vector<16x16xbf16>, vector<8x16xf32> -> vector<8x16xf32>
    %49 = arith.truncf %48 : vector<8x16xf32> to vector<8x16xbf16>
    %50 = arith.truncf %27 : vector<16x128xf32> to vector<16x128xbf16>
    %cst_15 = arith.constant dense<0.000000e+00> : vector<8x128xf32>
    %51 = tpu.matmul %49, %50, %cst_15 {dimension_numbers = #tpu.dot_dimension_numbers<[1], [0], [0], [1], [0, 0, 1, 1], [], []>} : vector<8x16xbf16>, vector<16x128xbf16>, vector<8x128xf32> -> vector<8x128xf32>
    %c0_16 = arith.constant 0 : index
    %c0_17 = arith.constant 0 : index
    %52 = vector.load %arg4[%c0_16, %c0_17] : memref<8x1xf32, #tpu.memory_space<vmem>>, vector<8x1xf32>
    %53 = vector.broadcast %52 : vector<8x1xf32> to vector<8x128xf32>
    %54 = arith.addf %51, %53 : vector<8x128xf32>
    %55 = vector.broadcast %13 : vector<1x128xf32> to vector<8x128xf32>
    %56 = arith.mulf %54, %55 : vector<8x128xf32>
    %57 = vector.shape_cast %56 : vector<8x128xf32> to vector<1x8x128xf32>
    %cst_18 = arith.constant dense<0.000000e+00> : vector<1xf32>
    %58 = vector.multi_reduction <add>, %57, %cst_18 [1, 2] : vector<1x8x128xf32> to vector<1xf32>
    %59 = vector.shape_cast %58 : vector<1xf32> to vector<1x1x1xf32>
    %60 = vector.extract %59[0, 0, 0] : f32 from vector<1x1x1xf32>
    %61 = vector.broadcast %60 : f32 to vector<1x1xf32>
    %62 = arith.mulf %56, %56 : vector<8x128xf32>
    %63 = vector.shape_cast %62 : vector<8x128xf32> to vector<1x8x128xf32>
    %cst_19 = arith.constant dense<0.000000e+00> : vector<1xf32>
    %64 = vector.multi_reduction <add>, %63, %cst_19 [1, 2] : vector<1x8x128xf32> to vector<1xf32>
    %65 = vector.shape_cast %64 : vector<1xf32> to vector<1x1x1xf32>
    %66 = vector.extract %65[0, 0, 0] : f32 from vector<1x1x1xf32>
    %67 = vector.broadcast %66 : f32 to vector<1x1xf32>
    %cst_20 = arith.constant 0.001953125 : f32
    %68 = vector.broadcast %cst_20 : f32 to vector<1x1xf32>
    %69 = arith.mulf %61, %68 : vector<1x1xf32>
    %cst_21 = arith.constant 0.001953125 : f32
    %70 = vector.broadcast %cst_21 : f32 to vector<1x1xf32>
    %71 = arith.mulf %67, %70 : vector<1x1xf32>
    %72 = arith.mulf %69, %69 : vector<1x1xf32>
    %73 = arith.subf %71, %72 : vector<1x1xf32>
    %cst_22 = arith.constant 9.99999974E-6 : f32
    %74 = vector.broadcast %cst_22 : f32 to vector<1x1xf32>
    %75 = arith.addf %73, %74 : vector<1x1xf32>
    %76 = math.rsqrt %75 : vector<1x1xf32>
    %c0_23 = arith.constant 0 : index
    %c0_24 = arith.constant 0 : index
    %77 = vector.load %arg5[%c0_23, %c0_24] : memref<8x1xf32, #tpu.memory_space<vmem>>, vector<8x1xf32>
    %78 = vector.broadcast %76 : vector<1x1xf32> to vector<8x1xf32>
    %79 = arith.mulf %78, %77 : vector<8x1xf32>
    %c0_25 = arith.constant 0 : index
    %c0_26 = arith.constant 0 : index
    %80 = vector.load %arg6[%c0_25, %c0_26] : memref<8x1xf32, #tpu.memory_space<vmem>>, vector<8x1xf32>
    %81 = vector.broadcast %69 : vector<1x1xf32> to vector<8x1xf32>
    %82 = arith.mulf %81, %79 : vector<8x1xf32>
    %83 = arith.subf %80, %82 : vector<8x1xf32>
    %84 = vector.broadcast %79 : vector<8x1xf32> to vector<8x128xf32>
    %85 = arith.mulf %54, %84 : vector<8x128xf32>
    %86 = vector.broadcast %83 : vector<8x1xf32> to vector<8x128xf32>
    %87 = arith.addf %85, %86 : vector<8x128xf32>
    %c0_27 = arith.constant 0 : index
    %c0_28 = arith.constant 0 : index
    %c0_29 = arith.constant 0 : index
    %88 = vector.load %arg8[%c0_27, %c0_28, %c0_29] : memref<1x8x128xf32, #tpu.memory_space<vmem>>, vector<1x8x128xf32>
    %89 = vector.shape_cast %88 : vector<1x8x128xf32> to vector<8x128xf32>
    %90 = vector.shape_cast %87 : vector<8x128xf32> to vector<1x8x128xf32>
    tpu.vector_store %arg8[%c0_27, %c0_28, %c0_29], %90 {strides = array<i32>} : memref<1x8x128xf32, #tpu.memory_space<vmem>>, vector<1x8x128xf32>,
    return
  }
  func.func @transform_0(%arg0: i32) -> (i32, i32, i32) {
    %c0_i32 = arith.constant 0 : i32
    %c0_i32_0 = arith.constant 0 : i32
    %c0_i32_1 = arith.constant 0 : i32
    return %arg0, %c0_i32, %c0_i32_0 : i32, i32, i32
  }
  func.func @transform_1(%arg0: i32) -> (i32, i32) {
    %c0_i32 = arith.constant 0 : i32
    %c0_i32_0 = arith.constant 0 : i32
    %c0_i32_1 = arith.constant 0 : i32
    return %c0_i32, %c0_i32_0 : i32, i32
  }
  func.func @transform_2(%arg0: i32) -> (i32, i32) {
    %c0_i32 = arith.constant 0 : i32
    %c0_i32_0 = arith.constant 0 : i32
    %c0_i32_1 = arith.constant 0 : i32
    return %c0_i32, %c0_i32_0 : i32, i32
  }
  func.func @transform_3(%arg0: i32) -> (i32, i32) {
    %c0_i32 = arith.constant 0 : i32
    %c0_i32_0 = arith.constant 0 : i32
    %c0_i32_1 = arith.constant 0 : i32
    return %c0_i32, %c0_i32_0 : i32, i32
  }
  func.func @transform_4(%arg0: i32) -> (i32, i32) {
    %c0_i32 = arith.constant 0 : i32
    %c0_i32_0 = arith.constant 0 : i32
    %c0_i32_1 = arith.constant 0 : i32
    return %c0_i32, %c0_i32_0 : i32, i32
  }
  func.func @transform_5(%arg0: i32) -> (i32, i32) {
    %c0_i32 = arith.constant 0 : i32
    %c0_i32_0 = arith.constant 0 : i32
    %c0_i32_1 = arith.constant 0 : i32
    return %c0_i32, %c0_i32_0 : i32, i32
  }
  func.func @transform_6(%arg0: i32) -> (i32, i32) {
    %c0_i32 = arith.constant 0 : i32
    %c0_i32_0 = arith.constant 0 : i32
    %c0_i32_1 = arith.constant 0 : i32
    return %c0_i32, %c0_i32_0 : i32, i32
  }
  func.func @transform_7(%arg0: i32) -> (i32, i32, i32) {
    %c0_i32 = arith.constant 0 : i32
    %c0_i32_0 = arith.constant 0 : i32
    %c0_i32_1 = arith.constant 0 : i32
    return %arg0, %c0_i32, %c0_i32_0 : i32, i32, i32
  }
}

</mosaic_0001>

<llo_original>
// kernel: tpu_custom_call.1
$region0: #{tpu_custom_call.1}
  #allocation0 [shape = 'u32[]', space=smem, size = 0x4, offset = 0x4, fixed_abs, tag = 'smem constant byte address 0x4 - core index']
  #allocation1 [shape = 'u32[144,128]{1,0:T(1,128)}', space=vmem, size = 0x12000, scoped, tag = 'internal scratch']
  %s0 = inlined_call_operand.vmem [shape: f32[2,8,128], index: 0, kind: input, shape index: {}]
  %s1 = inlined_call_operand.vmem [shape: f32[48,8], index: 1, kind: input, shape index: {}]
  %s2 = inlined_call_operand.vmem [shape: f32[8,16], index: 2, kind: input, shape index: {}]
  %s3 = inlined_call_operand.vmem [shape: f32[8,1], index: 3, kind: input, shape index: {}]
  %s4 = inlined_call_operand.vmem [shape: f32[8,1], index: 4, kind: input, shape index: {}]
  %s5 = inlined_call_operand.vmem [shape: f32[8,1], index: 5, kind: input, shape index: {}]
  %s6 = inlined_call_operand.vmem [shape: f32[16,16], index: 6, kind: input, shape index: {}]
  %s7 = inlined_call_operand.hbm [shape: f32[2,8,128], index: 7, kind: output, shape index: {}]
  %s8 = sld [smem:[#allocation0]]
  $region61: #{tpu_custom_call.1} parent=0
    _
  %s10 = ssub.s32 1, %s8
  %s11 = scalar_select 0, %s10, %s8
  $region1: #{tpu_custom_call.1} parent=0
    #allocation2 [shape = 'u8[8192]{0}', space=vmem, size = 0x2000, scoped, tag = 'output window, operand 0']
    #allocation3 [shape = 's32[2]{0}', space=sflag, size = 0x8, scoped, tag = 'scoped memory for tpu_custom_call.1']
    %12 = vsyncpa [#allocation3], 0
    %s13 = scalar_lea.sflag [#allocation3], 1
    %14 = vsyncpa %s13, 0
    loop: start=0, step=1, limit=4
    $region2: #{tpu_custom_call.1} parent=1 // loop_pre_header
      _
    $region3: #{tpu_custom_call.1} parent=1 // loop_header
      %s16 = sphi 0, %s20
      %p17 = scmp.ge.s32.totalorder %s16, 4
      %s26 = sphi 0, %s28
      %s29 = sphi 0, %s26
      %s30 = sphi 0, %s29
      %s46 = sphi 0, %s30
      %s50 = sphi 0, %s50
      %s52 = sphi 0, %s50
      %s53 = sphi 0, %s52
      %s67 = sphi 0, %s53
      %s71 = sphi 0, %s71
      %s73 = sphi 0, %s71
      %s74 = sphi 0, %s73
      %s88 = sphi 0, %s74
      %s92 = sphi 0, %s92
      %s94 = sphi 0, %s92
      %s95 = sphi 0, %s94
      %s109 = sphi 0, %s95
      %s113 = sphi 0, %s113
      %s115 = sphi 0, %s113
      %s116 = sphi 0, %s115
      %s130 = sphi 0, %s116
      %s134 = sphi 0, %s134
      %s136 = sphi 0, %s134
      %s137 = sphi 0, %s136
      %s151 = sphi 0, %s137
      %s155 = sphi 0, %s155
      %s157 = sphi 0, %s155
      %s158 = sphi 0, %s157
      %s172 = sphi 0, %s158
      %s178 = sphi 0, %s180
      %s181 = sphi 0, %s178
      %s182 = sphi 0, %s181
      %s198 = sphi 0, %s182
    $region4: #{tpu_custom_call.1} parent=1 // loop_header_branch
      %19 = sbr.rel (%p17) target = $region8
    $region5: #{tpu_custom_call.1} parent=1 // loop_body
      %s21 = ssub.s32 %s16, 1
      %s22 = ssub.s32 %s16, 2
      %s23 = sadd.s32 %s16, 1
      %s24 = ssub.s32 %s16, %s23
      %p25 = scmp.eq.s32.totalorder %s24, 0
      %s27 = sadd.s32 %s26, 1
      %s28 = scalar_select %p25, %s26, %s27
      %p31 = pneg %p25
      %p32 = scmp.eq.s32.totalorder %s16, 1
      %p33 = por %p31, %p32
      %p34 = scmp.ne.s32.totalorder %s26, %s29
      %p35 = scmp.eq.s32.totalorder %s16, 0
      %p36 = por %p34, %p35
      %p37 = scmp.ne.s32.totalorder %s26, %s29
      %p38 = scmp.eq.s32.totalorder %s21, 1
      %p39 = por %p37, %p38
      %p40 = scmp.ne.s32.totalorder %s29, %s30
      %p41 = scmp.eq.s32.totalorder %s21, 0
      %p42 = por %p40, %p41
      %p43 = scmp.ne.s32.totalorder %s29, %s30
      %p44 = scmp.eq.s32.totalorder %s22, 1
      %p45 = por %p43, %p44
      %p47 = scmp.ne.s32.totalorder %s30, %s46
      %p48 = scmp.eq.s32.totalorder %s22, 0
      %p49 = por %p47, %p48
      %s51 = sadd.s32 %s50, 1
      %p54 = scmp.eq.s32.totalorder %s16, 1
      %p55 = scmp.ne.s32.totalorder %s50, %s52
      %p56 = scmp.eq.s32.totalorder %s16, 0
      %p57 = por %p55, %p56
      %p58 = scmp.ne.s32.totalorder %s50, %s52
      %p59 = scmp.eq.s32.totalorder %s21, 1
      %p60 = por %p58, %p59
      %p61 = scmp.ne.s32.totalorder %s52, %s53
      %p62 = scmp.eq.s32.totalorder %s21, 0
      %p63 = por %p61, %p62
      %p64 = scmp.ne.s32.totalorder %s52, %s53
      %p65 = scmp.eq.s32.totalorder %s22, 1
      %p66 = por %p64, %p65
      %p68 = scmp.ne.s32.totalorder %s53, %s67
      %p69 = scmp.eq.s32.totalorder %s22, 0
      %p70 = por %p68, %p69
      %s72 = sadd.s32 %s71, 1
      %p75 = scmp.eq.s32.totalorder %s16, 1
      %p76 = scmp.ne.s32.totalorder %s71, %s73
      %p77 = scmp.eq.s32.totalorder %s16, 0
      %p78 = por %p76, %p77
      %p79 = scmp.ne.s32.totalorder %s71, %s73
      %p80 = scmp.eq.s32.totalorder %s21, 1
      %p81 = por %p79, %p80
      %p82 = scmp.ne.s32.totalorder %s73, %s74
      %p83 = scmp.eq.s32.totalorder %s21, 0
      %p84 = por %p82, %p83
      %p85 = scmp.ne.s32.totalorder %s73, %s74
      %p86 = scmp.eq.s32.totalorder %s22, 1
      %p87 = por %p85, %p86
      %p89 = scmp.ne.s32.totalorder %s74, %s88
      %p90 = scmp.eq.s32.totalorder %s22, 0
      %p91 = por %p89, %p90
      %s93 = sadd.s32 %s92, 1
      %p96 = scmp.eq.s32.totalorder %s16, 1
      %p97 = scmp.ne.s32.totalorder %s92, %s94
      %p98 = scmp.eq.s32.totalorder %s16, 0
      %p99 = por %p97, %p98
      %p100 = scmp.ne.s32.totalorder %s92, %s94
      %p101 = scmp.eq.s32.totalorder %s21, 1
      %p102 = por %p100, %p101
      %p103 = scmp.ne.s32.totalorder %s94, %s95
      %p104 = scmp.eq.s32.totalorder %s21, 0
      %p105 = por %p103, %p104
      %p106 = scmp.ne.s32.totalorder %s94, %s95
      %p107 = scmp.eq.s32.totalorder %s22, 1
      %p108 = por %p106, %p107
      %p110 = scmp.ne.s32.totalorder %s95, %s109
      %p111 = scmp.eq.s32.totalorder %s22, 0
      %p112 = por %p110, %p111
      %s114 = sadd.s32 %s113, 1
      %p117 = scmp.eq.s32.totalorder %s16, 1
      %p118 = scmp.ne.s32.totalorder %s113, %s115
      %p119 = scmp.eq.s32.totalorder %s16, 0
      %p120 = por %p118, %p119
      %p121 = scmp.ne.s32.totalorder %s113, %s115
      %p122 = scmp.eq.s32.totalorder %s21, 1
      %p123 = por %p121, %p122
      %p124 = scmp.ne.s32.totalorder %s115, %s116
      %p125 = scmp.eq.s32.totalorder %s21, 0
      %p126 = por %p124, %p125
      %p127 = scmp.ne.s32.totalorder %s115, %s116
      %p128 = scmp.eq.s32.totalorder %s22, 1
      %p129 = por %p127, %p128
      %p131 = scmp.ne.s32.totalorder %s116, %s130
      %p132 = scmp.eq.s32.totalorder %s22, 0
      %p133 = por %p131, %p132
      %s135 = sadd.s32 %s134, 1
      %p138 = scmp.eq.s32.totalorder %s16, 1
      %p139 = scmp.ne.s32.totalorder %s134, %s136
      %p140 = scmp.eq.s32.totalorder %s16, 0
      %p141 = por %p139, %p140
      %p142 = scmp.ne.s32.totalorder %s134, %s136
      %p143 = scmp.eq.s32.totalorder %s21, 1
      %p144 = por %p142, %p143
      %p145 = scmp.ne.s32.totalorder %s136, %s137
      %p146 = scmp.eq.s32.totalorder %s21, 0
      %p147 = por %p145, %p146
      %p148 = scmp.ne.s32.totalorder %s136, %s137
      %p149 = scmp.eq.s32.totalorder %s22, 1
      %p150 = por %p148, %p149
      %p152 = scmp.ne.s32.totalorder %s137, %s151
      %p153 = scmp.eq.s32.totalorder %s22, 0
      %p154 = por %p152, %p153
      %s156 = sadd.s32 %s155, 1
      %p159 = scmp.eq.s32.totalorder %s16, 1
      %p160 = scmp.ne.s32.totalorder %s155, %s157
      %p161 = scmp.eq.s32.totalorder %s16, 0
      %p162 = por %p160, %p161
      %p163 = scmp.ne.s32.totalorder %s155, %s157
      %p164 = scmp.eq.s32.totalorder %s21, 1
      %p165 = por %p163, %p164
      %p166 = scmp.ne.s32.totalorder %s157, %s158
      %p167 = scmp.eq.s32.totalorder %s21, 0
      %p168 = por %p166, %p167
      %p169 = scmp.ne.s32.totalorder %s157, %s158
      %p170 = scmp.eq.s32.totalorder %s22, 1
      %p171 = por %p169, %p170
      %p173 = scmp.ne.s32.totalorder %s158, %s172
      %p174 = scmp.eq.s32.totalorder %s22, 0
      %p175 = por %p173, %p174
      %s176 = ssub.s32 %s16, %s23
      %p177 = scmp.eq.s32.totalorder %s176, 0
      %s179 = sadd.s32 %s178, 1
      %s180 = scalar_select %p177, %s178, %s179
      %p183 = pneg %p177
      %p184 = scmp.eq.s32.totalorder %s16, 1
      %p185 = por %p183, %p184
      %p186 = scmp.ne.s32.totalorder %s178, %s181
      %p187 = scmp.eq.s32.totalorder %s16, 0
      %p188 = por %p186, %p187
      %p189 = scmp.ne.s32.totalorder %s178, %s181
      %p190 = scmp.eq.s32.totalorder %s21, 1
      %p191 = por %p189, %p190
      %p192 = scmp.ne.s32.totalorder %s181, %s182
      %p193 = scmp.eq.s32.totalorder %s21, 0
      %p194 = por %p192, %p193
      %p195 = scmp.ne.s32.totalorder %s181, %s182
      %p196 = scmp.eq.s32.totalorder %s22, 1
      %p197 = por %p195, %p196
      %p199 = scmp.ne.s32.totalorder %s182, %s198
      %p200 = scmp.eq.s32.totalorder %s22, 0
      %p201 = por %p199, %p200
      %p202 = scmp.le.s32.totalorder 1, %s16
      %p203 = scmp.lt.s32.totalorder %s16, 3
      %p204 = pnand %p202, %p203
      %p205 = pneg %p204
      // Predicated region
      $region9: #{tpu_custom_call.1} parent=5 // pred_check
        _
      $region10: #{tpu_custom_call.1} parent=5 // pred_check_branch
        %207 = sbr.rel (%p204) target = $region12
      $region11: #{tpu_custom_call.1} parent=5 // pred_region
        %s208 = ssub.s32 %s16, 1
        // Predicated region
        $region13: #{tpu_custom_call.1} parent=11 // pred_check
          %p209 = pneg %p63
        $region14: #{tpu_custom_call.1} parent=11 // pred_check_branch
          %211 = sbr.rel (%p209) target = $region16
        $region15: #{tpu_custom_call.1} parent=11 // pred_region
          _
        $region16: #{tpu_custom_call.1} parent=11 // pred_fallthru
          _
        // Predicated region
        $region17: #{tpu_custom_call.1} parent=11 // pred_check
          %p212 = pneg %p84
        $region18: #{tpu_custom_call.1} parent=11 // pred_check_branch
          %214 = sbr.rel (%p212) target = $region20
        $region19: #{tpu_custom_call.1} parent=11 // pred_region
          _
        $region20: #{tpu_custom_call.1} parent=11 // pred_fallthru
          _
        // Predicated region
        $region21: #{tpu_custom_call.1} parent=11 // pred_check
          %p215 = pneg %p105
        $region22: #{tpu_custom_call.1} parent=11 // pred_check_branch
          %217 = sbr.rel (%p215) target = $region24
        $region23: #{tpu_custom_call.1} parent=11 // pred_region
          _
        $region24: #{tpu_custom_call.1} parent=11 // pred_fallthru
          _
        // Predicated region
        $region25: #{tpu_custom_call.1} parent=11 // pred_check
          %p218 = pneg %p126
        $region26: #{tpu_custom_call.1} parent=11 // pred_check_branch
          %220 = sbr.rel (%p218) target = $region28
        $region27: #{tpu_custom_call.1} parent=11 // pred_region
          _
        $region28: #{tpu_custom_call.1} parent=11 // pred_fallthru
          _
        // Predicated region
        $region29: #{tpu_custom_call.1} parent=11 // pred_check
          %p221 = pneg %p147
        $region30: #{tpu_custom_call.1} parent=11 // pred_check_branch
          %223 = sbr.rel (%p221) target = $region32
        $region31: #{tpu_custom_call.1} parent=11 // pred_region
          _
        $region32: #{tpu_custom_call.1} parent=11 // pred_fallthru
          _
        // Predicated region
        $region33: #{tpu_custom_call.1} parent=11 // pred_check
          %p224 = pneg %p168
        $region34: #{tpu_custom_call.1} parent=11 // pred_check_branch
          %226 = sbr.rel (%p224) target = $region36
        $region35: #{tpu_custom_call.1} parent=11 // pred_region
          _
        $region36: #{tpu_custom_call.1} parent=11 // pred_fallthru
          _
      $region12: #{tpu_custom_call.1} parent=5 // pred_fallthru
        _
      %p227 = scmp.lt.s32.totalorder %s16, 2
      // Predicated region
      $region37: #{tpu_custom_call.1} parent=5 // pred_check
        %p228 = pneg %p227
      $region38: #{tpu_custom_call.1} parent=5 // pred_check_branch
        %230 = sbr.rel (%p228) target = $region40
      $region39: #{tpu_custom_call.1} parent=5 // pred_region
        // Predicated region
        $region41: #{tpu_custom_call.1} parent=39 // pred_check
          %p231 = pneg %p36
        $region42: #{tpu_custom_call.1} parent=39 // pred_check_branch
          %233 = sbr.rel (%p231) target = $region44
        $region43: #{tpu_custom_call.1} parent=39 // pred_region
          %p234 = scmp.lt.s32.totalorder %s16, 1
          %s235 = scalar_select %p234, %s16, 1
          %s236 = smul.addr %s235, 8
          %s237 = scalar_lea.vmem %s0, %s236
        $region44: #{tpu_custom_call.1} parent=39 // pred_fallthru
          _
      $region40: #{tpu_custom_call.1} parent=5 // pred_fallthru
        _
      %p238 = scmp.le.s32.totalorder 1, %s16
      %p239 = scmp.lt.s32.totalorder %s16, 3
      %p240 = pnand %p238, %p239
      %p241 = pneg %p240
      // Predicated region
      $region45: #{tpu_custom_call.1} parent=5 // pred_check
        _
      $region46: #{tpu_custom_call.1} parent=5 // pred_check_branch
        %243 = sbr.rel (%p240) target = $region48
      $region47: #{tpu_custom_call.1} parent=5 // pred_region
        %s244 = ssub.s32 %s16, 1
        %p245 = scmp.lt.s32.totalorder %s21, 1
        %s246 = scalar_select %p245, %s21, 1
        %s247 = smul.addr %s246, 8
        %s248 = scalar_lea.vmem %s0, %s247
        %p249 = pneg %p42
        %p250 = pneg %p39
        %p251 = pneg %p63
        %p252 = pneg %p60
        %p253 = pneg %p84
        %p254 = pneg %p81
        %p255 = pneg %p105
        %p256 = pneg %p102
        %p257 = pneg %p126
        %p258 = pneg %p123
        %p259 = pneg %p147
        %p260 = pneg %p144
        %p261 = pneg %p168
        %p262 = pneg %p165
        %p263 = pneg %p194
        %p264 = pneg %p191
        %s265 = sand.u32 %s181, 1
        %s266 = scalar_lea.sflag [#allocation3], %s265
        %s267 = sand.u32 %s181, 1
        %s268 = smul.addr %s267, 8
        %s269 = scalar_lea.vmem [#allocation2], %s268
        %p270 = scmp.lt.s32.totalorder %s21, 1
        %s271 = scalar_select %p270, %s21, 1
        %s272 = smul.addr %s271, 8
        %s273 = scalar_lea.vmem %s0, %s272
        %v275 = vld [vmem:[%s273] sm:$0xff]
        %v276 = vld [vmem:[%s1] sm:$0xff]
        %v277 = vld [vmem:[%s1 + $0x8] sm:$0xff]
        %v278 = vld [vmem:[%s1 + $0x10] sm:$0xff]
        %v279 = vld [vmem:[%s1 + $0x18] sm:$0xff]
        %v280 = vld [vmem:[%s1 + $0x20] sm:$0xff]
        %v281 = vld [vmem:[%s1 + $0x28] sm:$0xff]
        %v282 = vpack.c.bf16 %v277, %v276
        %v283 = vpack.c.bf16 %v279, %v278
        %v284 = vpack.c.bf16 %v281, %v280
        %v285 = vpack.c.bf16 %v275, %v275
        %vm286 = vcmask 64512
        %v288 = vsel %vm286, %v282, 0
        %v291 = vsel %vm286, %v283, 0
        %v294 = vsel %vm286, %v284, 0
        %vm296 = vcmask 1043456
        %v298 = vsel %vm296, %v285, 0
        %300 = vmatprep.subr.bf16.mxu0 0
        %301 = vmatpush1.bf16.msra.mxu0 %v298
        %302 = vmatprep.subr.bf16.mxu0 0
        %303 = vmatpush1.bf16.msra.mxu0 0
        %304 = vmatprep.subr.bf16.mxu0 0
        %305 = vmatpush1.bf16.msra.mxu0 0
        %306 = vmatprep.subr.bf16.mxu0 0
        %307 = vmatpush1.bf16.msra.mxu0 0
        %308 = vmatprep.subr.bf16.mxu0 0
        %309 = vmatpush1.bf16.msra.mxu0 0
        %310 = vmatprep.subr.bf16.mxu0 0
        %311 = vmatpush1.bf16.msra.mxu0 0
        %312 = vmatprep.subr.bf16.mxu0 0
        %313 = vmatpush1.bf16.msra.mxu0 0
        %314 = vmatprep.subr.bf16.mxu0 0
        %315 = vmatpush1.bf16.msra.mxu0 0
        %316 = vmatprep.subr.bf16.mxu0 0
        %317 = vmatpush1.bf16.msra.mxu0 0
        %318 = vmatprep.subr.bf16.mxu0 0
        %319 = vmatpush1.bf16.msra.mxu0 0
        %320 = vmatprep.subr.bf16.mxu0 0
        %321 = vmatpush1.bf16.msra.mxu0 0
        %322 = vmatprep.subr.bf16.mxu0 0
        %323 = vmatpush1.bf16.msra.mxu0 0
        %324 = vmatprep.subr.bf16.mxu0 0
        %325 = vmatpush1.bf16.msra.mxu0 0
        %326 = vmatprep.subr.bf16.mxu0 0
        %327 = vmatpush1.bf16.msra.mxu0 0
        %328 = vmatprep.subr.bf16.mxu0 0
        %329 = vmatpush1.bf16.msra.mxu0 0
        %330 = vmatprep.subr.bf16.mxu0 0
        %331 = vmatpush1.bf16.msra.mxu0 0
        %332 = vmatprep.mubr.bf16.mxu0 0
        %333 = vmatmul.mubr.bf16.gmra.mrb[0].mxu0 %v288
        %v334 = vpop.f32.mrb[0].mxu0
        %v335 = vadd.f32 0.0, %v334
        %v336 = vpop.f32.mrb[0].mxu0
        %v337 = vpop.f32.mrb[0].mxu0
        %v338 = vadd.f32 0.0, %v337
        %v339 = vpop.f32.mrb[0].mxu0
        %340 = vmatprep.mubr.bf16.mxu0 0
        %341 = vmatmul.mubr.bf16.gmra.mrb[0].mxu0 %v291
        %v342 = vpop.f32.mrb[0].mxu0
        %v343 = vadd.f32 0.0, %v342
        %v344 = vpop.f32.mrb[0].mxu0
        %v345 = vpop.f32.mrb[0].mxu0
        %v346 = vadd.f32 0.0, %v345
        %v347 = vpop.f32.mrb[0].mxu0
        %348 = vmatprep.mubr.bf16.mxu0 0
        %349 = vmatmul.mubr.bf16.gmra.mrb[0].mxu0 %v294
        %v350 = vpop.f32.mrb[0].mxu0
        %v351 = vadd.f32 0.0, %v350
        %v352 = vpop.f32.mrb[0].mxu0
        %v353 = vpop.f32.mrb[0].mxu0
        %v354 = vadd.f32 0.0, %v353
        %v355 = vpop.f32.mrb[0].mxu0
        %356 = vdwg.mxu0
        %v357 = vlaneseq
        %v358 = vand.u32 %v357, 127
        %vm359 = vcmp.lt.s32.totalorder %v358, 64
        %v360 = vsel %vm359, 1, 0
        %v361 = vcvt.s32.f32 %v360
        %v362 = vrot.slane %v335, 4
        %v363 = vmax.f32 %v335, %v362
        %v364 = vrot.slane %v363, 2
        %v365 = vmax.f32 %v363, %v364
        %v366 = vrot.slane %v365, 1
        %v367 = vmax.f32 %v365, %v366
        %v368 = vrot.slane %v338, 4
        %v369 = vmax.f32 %v338, %v368
        %v370 = vrot.slane %v369, 2
        %v371 = vmax.f32 %v369, %v370
        %v372 = vrot.slane %v371, 1
        %v373 = vmax.f32 %v371, %v372
        %v374 = vsub.f32 %v335, %v367
        %v375 = vsub.f32 %v338, %v373
        %v376 = vmul.f32 %v374, 1.442695
        %v377 = vpow.pop %v376
        %v378 = vmul.f32 %v375, 1.442695
        %v379 = vpow.pop %v378
        %v380 = vrot.slane %v377, 4
        %v381 = vadd.f32 %v377, %v380
        %v382 = vrot.slane %v381, 2
        %v383 = vadd.f32 %v381, %v382
        %v384 = vrot.slane %v383, 1
        %v385 = vadd.f32 %v383, %v384
        %v386 = vrot.slane %v379, 4
        %v387 = vadd.f32 %v379, %v386
        %v388 = vrot.slane %v387, 2
        %v389 = vadd.f32 %v387, %v388
        %v390 = vrot.slane %v389, 1
        %v391 = vadd.f32 %v389, %v390
        %v392 = vrcp.pop %v385
        %v393 = vrcp.pop %v391
        %v394 = vmul.f32 %v392, 0.35355338
        %v395 = vmul.f32 %v393, 0.35355338
        %v396 = vmul.f32 %v377, %v394
        %v397 = vmul.f32 %v379, %v395
        %398 = vmax.xlane.f32.xlu0 %v343
        %v399 = vpop.xlane.xlu0 %398
        %400 = vmax.xlane.f32.xlu0 %v346
        %v401 = vpop.xlane.xlu0 %400
        %v402 = vsub.f32 %v343, %v399
        %v403 = vsub.f32 %v346, %v401
        %v404 = vmul.f32 %v402, 1.442695
        %v405 = vpow.pop %v404
        %v406 = vmul.f32 %v403, 1.442695
        %v407 = vpow.pop %v406
        %v408 = vmul.f32 %v405, %v361
        %v409 = vmul.f32 %v407, %v361
        %410 = vadd.xlane.f32.xlu0 %v408
        %v411 = vpop.xlane.xlu0 %410
        %412 = vadd.xlane.f32.xlu0 %v409
        %v413 = vpop.xlane.xlu0 %412
        %v414 = vrcp.pop %v411
        %v415 = vrcp.pop %v413
        %v416 = vmul.f32 %v408, %v414
        %v417 = vmul.f32 %v409, %v415
        %v418 = vpack.c.bf16 %v417, %v416
        %v419 = vpack.c.bf16 %v354, %v351
        %420 = vmatprep.subr.bf16.mxu0 0
        %421 = vmatpush1.bf16.xpose.msra.mxu0 %v419
        %422 = vmatprep.subr.bf16.mxu0 0
        %423 = vmatpush1.bf16.xpose.msra.mxu0 0
        %424 = vmatprep.subr.bf16.mxu0 0
        %425 = vmatpush1.bf16.xpose.msra.mxu0 0
        %426 = vmatprep.subr.bf16.mxu0 0
        %427 = vmatpush1.bf16.xpose.msra.mxu0 0
        %428 = vmatprep.subr.bf16.mxu0 0
        %429 = vmatpush1.bf16.xpose.msra.mxu0 0
        %430 = vmatprep.subr.bf16.mxu0 0
        %431 = vmatpush1.bf16.xpose.msra.mxu0 0
        %432 = vmatprep.subr.bf16.mxu0 0
        %433 = vmatpush1.bf16.xpose.msra.mxu0 0
        %434 = vmatprep.subr.bf16.mxu0 0
        %435 = vmatpush1.bf16.xpose.msra.mxu0 0
        %436 = vmatprep.subr.bf16.mxu0 0
        %437 = vmatpush1.bf16.xpose.msra.mxu0 0
        %438 = vmatprep.subr.bf16.mxu0 0
        %439 = vmatpush1.bf16.xpose.msra.mxu0 0
        %440 = vmatprep.subr.bf16.mxu0 0
        %441 = vmatpush1.bf16.xpose.msra.mxu0 0
        %442 = vmatprep.subr.bf16.mxu0 0
        %443 = vmatpush1.bf16.xpose.msra.mxu0 0
        %444 = vmatprep.subr.bf16.mxu0 0
        %445 = vmatpush1.bf16.xpose.msra.mxu0 0
        %446 = vmatprep.subr.bf16.mxu0 0
        %447 = vmatpush1.bf16.xpose.msra.mxu0 0
        %448 = vmatprep.subr.bf16.mxu0 0
        %449 = vmatpush1.bf16.xpose.msra.mxu0 0
        %450 = vmatprep.subr.bf16.mxu0 0
        %451 = vmatpush1.bf16.xpose.msra.mxu0 0
        %452 = vmatprep.mubr.bf16.mxu0 0
        %453 = vmatmul.mubr.bf16.gmra.mrb[0].mxu0 %v418
        %v454 = vpop.f32.mrb[0].mxu0
        %v455 = vadd.f32 0.0, %v454
        %v456 = vpop.f32.mrb[0].mxu0
        %v457 = vpop.f32.mrb[0].mxu0
        %v458 = vadd.f32 0.0, %v457
        %v459 = vpop.f32.mrb[0].mxu0
        %460 = vdwg.mxu0
        %v461 = vld [vmem:[%s6] sm:$0xff]
        %v462 = vld [vmem:[%s6 + $0x8] sm:$0xff]
        %v463 = vmul.f32 %v455, %v461
        %v464 = vmul.f32 %v458, %v462
        %v465 = vld [vmem:[%s2] sm:$0xff]
        %v466 = vpack.c.bf16 %v465, %v465
        %v467 = vpack.c.bf16 %v464, %v463
        %vm468 = vcmask 130048
        %v470 = vsel %vm468, %v466, 0
        %v473 = vsel %vm468, %v467, 0
        %475 = vmatprep.subr.bf16.mxu0 0
        %476 = vmatpush1.bf16.xpose.msra.mxu0 %v473
        %477 = vmatprep.subr.bf16.mxu0 0
        %478 = vmatpush1.bf16.xpose.msra.mxu0 0
        %479 = vmatprep.subr.bf16.mxu0 0
        %480 = vmatpush1.bf16.xpose.msra.mxu0 0
        %481 = vmatprep.subr.bf16.mxu0 0
        %482 = vmatpush1.bf16.xpose.msra.mxu0 0
        %483 = vmatprep.subr.bf16.mxu0 0
        %484 = vmatpush1.bf16.xpose.msra.mxu0 0
        %485 = vmatprep.subr.bf16.mxu0 0
        %486 = vmatpush1.bf16.xpose.msra.mxu0 0
        %487 = vmatprep.subr.bf16.mxu0 0
        %488 = vmatpush1.bf16.xpose.msra.mxu0 0
        %489 = vmatprep.subr.bf16.mxu0 0
        %490 = vmatpush1.bf16.xpose.msra.mxu0 0
        %491 = vmatprep.subr.bf16.mxu0 0
        %492 = vmatpush1.bf16.xpose.msra.mxu0 0
        %493 = vmatprep.subr.bf16.mxu0 0
        %494 = vmatpush1.bf16.xpose.msra.mxu0 0
        %495 = vmatprep.subr.bf16.mxu0 0
        %496 = vmatpush1.bf16.xpose.msra.mxu0 0
        %497 = vmatprep.subr.bf16.mxu0 0
        %498 = vmatpush1.bf16.xpose.msra.mxu0 0
        %499 = vmatprep.subr.bf16.mxu0 0
        %500 = vmatpush1.bf16.xpose.msra.mxu0 0
        %501 = vmatprep.subr.bf16.mxu0 0
        %502 = vmatpush1.bf16.xpose.msra.mxu0 0
        %503 = vmatprep.subr.bf16.mxu0 0
        %504 = vmatpush1.bf16.xpose.msra.mxu0 0
        %505 = vmatprep.subr.bf16.mxu0 0
        %506 = vmatpush1.bf16.xpose.msra.mxu0 0
        %507 = vmatprep.mubr.bf16.mxu0 0
        %508 = vmatmul.mubr.bf16.gmra.mrb[0].mxu0 %v470
        %v509 = vpop.f32.mrb[0].mxu0
        %v510 = vadd.f32 0.0, %v509
        %v511 = vpop.f32.mrb[0].mxu0
        %v512 = vpop.f32.mrb[0].mxu0
        %v513 = vpop.f32.mrb[0].mxu0
        %514 = vdwg.mxu0
        %v515 = vpack.c.bf16 %v510, %v510
        %v516 = vpack.c.bf16 %v397, %v396
        %v517 = vld [vmem:[%s3] sm:$0xff]
        %519 = vset.pattern.permute.xlu0 0
        %520 = vperm.xlu0 %519, %v517
        %v521 = vpop.permute.xlu0 %520
        %v524 = vsel %vm468, %v515, 0
        %526 = vmatprep.subr.bf16.mxu0 0
        %527 = vmatpush1.bf16.msra.mxu0 %v516
        %528 = vmatprep.subr.bf16.mxu0 0
        %529 = vmatpush1.bf16.msra.mxu0 0
        %530 = vmatprep.subr.bf16.mxu0 0
        %531 = vmatpush1.bf16.msra.mxu0 0
        %532 = vmatprep.subr.bf16.mxu0 0
        %533 = vmatpush1.bf16.msra.mxu0 0
        %534 = vmatprep.subr.bf16.mxu0 0
        %535 = vmatpush1.bf16.msra.mxu0 0
        %536 = vmatprep.subr.bf16.mxu0 0
        %537 = vmatpush1.bf16.msra.mxu0 0
        %538 = vmatprep.subr.bf16.mxu0 0
        %539 = vmatpush1.bf16.msra.mxu0 0
        %540 = vmatprep.subr.bf16.mxu0 0
        %541 = vmatpush1.bf16.msra.mxu0 0
        %542 = vmatprep.subr.bf16.mxu0 0
        %543 = vmatpush1.bf16.msra.mxu0 0
        %544 = vmatprep.subr.bf16.mxu0 0
        %545 = vmatpush1.bf16.msra.mxu0 0
        %546 = vmatprep.subr.bf16.mxu0 0
        %547 = vmatpush1.bf16.msra.mxu0 0
        %548 = vmatprep.subr.bf16.mxu0 0
        %549 = vmatpush1.bf16.msra.mxu0 0
        %550 = vmatprep.subr.bf16.mxu0 0
        %551 = vmatpush1.bf16.msra.mxu0 0
        %552 = vmatprep.subr.bf16.mxu0 0
        %553 = vmatpush1.bf16.msra.mxu0 0
        %554 = vmatprep.subr.bf16.mxu0 0
        %555 = vmatpush1.bf16.msra.mxu0 0
        %556 = vmatprep.subr.bf16.mxu0 0
        %557 = vmatpush1.bf16.msra.mxu0 0
        %558 = vmatprep.mubr.bf16.mxu0 0
        %559 = vmatmul.mubr.bf16.gmra.mrb[0].mxu0 %v524
        %v560 = vpop.f32.mrb[0].mxu0
        %v561 = vadd.f32 %v521, %v560
        %v562 = vpop.f32.mrb[0].mxu0
        %v563 = vpop.f32.mrb[0].mxu0
        %v564 = vpop.f32.mrb[0].mxu0
        %565 = vdwg.mxu0
        %v566 = vmul.f32 %v561, %v361
        %567 = vadd.xlane.f32.xlu0 %v566
        %v568 = vpop.xlane.xlu0 %567
        %v569 = vrot.slane %v568, 4
        %v570 = vadd.f32 %v568, %v569
        %v571 = vrot.slane %v570, 2
        %v572 = vadd.f32 %v570, %v571
        %v573 = vrot.slane %v572, 1
        %v574 = vadd.f32 %v572, %v573
        %s575 = vtos %v574
        %v576 = vstv %s575
        %v577 = vmul.f32 %v566, %v566
        %578 = vadd.xlane.f32.xlu0 %v577
        %v579 = vpop.xlane.xlu0 %578
        %v580 = vrot.slane %v579, 4
        %v581 = vadd.f32 %v579, %v580
        %v582 = vrot.slane %v581, 2
        %v583 = vadd.f32 %v581, %v582
        %v584 = vrot.slane %v583, 1
        %v585 = vadd.f32 %v583, %v584
        %s586 = vtos %v585
        %v587 = vstv %s586
        %v588 = vmul.f32 %v576, 0.001953125
        %v589 = vmul.f32 %v587, 0.001953125
        %v590 = vmul.f32 %v588, %v588
        %v591 = vsub.f32 %v589, %v590
        %v592 = vadd.f32 %v591, 1e-05
        %v593 = vrsqrt.pop %v592
        %v594 = vld [vmem:[%s4] sm:$0xff]
        %v595 = vmul.f32 %v593, %v594
        %v596 = vld [vmem:[%s5] sm:$0xff]
        %v597 = vmul.f32 %v588, %v595
        %v598 = vsub.f32 %v596, %v597
        %600 = vset.pattern.permute.xlu0 0
        %601 = vperm.xlu0 %600, %v595
        %v602 = vpop.permute.xlu0 %601
        %v604 = vmul.f32 %v561, %v602
        %606 = vset.pattern.permute.xlu0 0
        %607 = vperm.xlu0 %606, %v598
        %v608 = vpop.permute.xlu0 %607
        %v610 = vadd.f32 %v604, %v608
        %611 = vst [vmem:[%s269] sm:$0xff] %v610
        %s612 = sand.u32 %s181, 1
        %s613 = scalar_lea.sflag [#allocation3], %s612
        %s614 = sand.u32 %s181, 1
        %s615 = smul.addr %s614, 8
        %s616 = scalar_lea.vmem [#allocation2], %s615
        // Predicated region
        $region49: #{tpu_custom_call.1} parent=47 // pred_check
          %p617 = pneg %p191
        $region50: #{tpu_custom_call.1} parent=47 // pred_check_branch
          %619 = sbr.rel (%p617) target = $region52
        $region51: #{tpu_custom_call.1} parent=47 // pred_region
          %s621 = ssub.s32 128, 128
          %622 = vsyncadd %s613, %s621
          %s623 = smul.addr %s21, 128
          %s624 = scalar_lea.hbm %s7, %s623
          %s626 = sshll.u32 %s616, 4
          %s627 = int_to_ptr.vmem [resolvable:$true] %s626
          %629 = dma.vmem_to_hbm [thread:$0]  %s627, 128, %s624, %s613
        $region52: #{tpu_custom_call.1} parent=47 // pred_fallthru
          _
      $region48: #{tpu_custom_call.1} parent=5 // pred_fallthru
        _
      %p630 = scmp.le.s32.totalorder 2, %s16
      // Predicated region
      $region53: #{tpu_custom_call.1} parent=5 // pred_check
        %p631 = pneg %p630
      $region54: #{tpu_custom_call.1} parent=5 // pred_check_branch
        %633 = sbr.rel (%p631) target = $region56
      $region55: #{tpu_custom_call.1} parent=5 // pred_region
        %s634 = ssub.s32 %s16, 2
        // Predicated region
        $region57: #{tpu_custom_call.1} parent=55 // pred_check
          %p635 = pneg %p197
        $region58: #{tpu_custom_call.1} parent=55 // pred_check_branch
          %637 = sbr.rel (%p635) target = $region60
        $region59: #{tpu_custom_call.1} parent=55 // pred_region
          %s638 = sand.u32 %s182, 1
          %s639 = scalar_lea.sflag [#allocation3], %s638
          %s640 = sand.u32 %s182, 1
          %s641 = smul.addr %s640, 8
          %s642 = scalar_lea.vmem [#allocation2], %s641
          %643 = dma.done %s639, 128
        $region60: #{tpu_custom_call.1} parent=55 // pred_fallthru
          _
      $region56: #{tpu_custom_call.1} parent=5 // pred_fallthru
        _
    $region6: #{tpu_custom_call.1} parent=1 // loop_footer
      %s20 = sadd.s32 1, %s16
    $region7: #{tpu_custom_call.1} parent=1 // loop_footer_branch
      %15 = sbr.rel target = $region3
    $region8: #{tpu_custom_call.1} parent=1 // loop_exit
      _
    %644 = vsyncpa [#allocation3], 1
    %s645 = scalar_lea.sflag [#allocation3], 1
    %646 = vsyncpa %s645, 1

</llo_original>
